<compile_context>
chip_gen: v7x
topology: tpu7x:2x2x1
jax: 0.10.0
libtpu: 0.0.40
codegen_flags: <defaults>
</compile_context>

<pallas_src>
import jax
import jax.numpy as jnp
from jax.experimental import pallas as pl
from jax.experimental.pallas import tpu as pltpu


LANE = 128
SUBLANE = 16  # bf16 sublane packing; also a multiple of the f32 sublane (8)


def _round_up(x, m):
    return ((x + m - 1) // m) * m


def _vmem_capacity_bytes():
    try:
        return int(pltpu.get_tpu_info().vmem_capacity_bytes)
    except Exception:
        return 64 * 1024 * 1024  # conservative fallback (v7x per-core VMEM)


def _select_tile_and_vmem(B, Lp, KDp, Fp, FCp):
    """Pick batch tile TB against the per-generation VMEM budget and the
    scoped-VMEM limit to request from Mosaic."""
    cap = _vmem_capacity_bytes()
    budget = int(cap * 0.6)  # headroom for Mosaic internals / semaphores
    weight_bytes = KDp * Fp * 2 + Fp * FCp * 2 + (Fp + FCp) * 4
    # Per batch-row VMEM: double-buffered bf16 window block, f32 conv slab
    # (value + relu/pool intermediate), double-buffered f32 output block.
    per_row = 2 * Lp * KDp * 2 + 2 * Lp * Fp * 4 + 2 * FCp * 4
    tb = max(8, (budget - weight_bytes) // max(per_row, 1))
    tb = min(tb, 512, _round_up(B, 8))
    tb = max(8, (tb // 8) * 8)

    def n_steps(t):
        return _round_up(B, t) // t

    # Keep >=4 grid steps (2 per v7x TensorCore) while TB stays large,
    # otherwise settle for >=2 steps so the DMA pipeline has work to overlap.
    while tb >= 256 and n_steps(tb) < 4:
        tb = max(8, (tb // 2 // 8) * 8)
    while tb > 8 and n_steps(tb) < 2:
        tb = max(8, (tb // 2 // 8) * 8)

    est = 2 * weight_bytes + per_row * tb + (1 << 20)
    vmem_limit = min(int(cap * 0.75), max(est, 32 << 20))
    return tb, vmem_limit


def convmf_item_kernel(win_ref, cw_ref, cb_ref, fw_ref, fb_ref, out_ref):
    """Fused conv (one im2col matmul) + ReLU + global max-pool + linear for
    one batch tile.

    win_ref: (TB, Lp, KDp) bf16  im2col word-embedding windows
    cw_ref : (KDp, Fp)     bf16  conv weight (im2col layout, lane-padded)
    cb_ref : (1, Fp)       f32   conv bias (zero-padded)
    fw_ref : (Fp, FCp)     bf16  fc weight (pre-transposed, lane-padded)
    fb_ref : (1, FCp)      f32   fc bias (zero-padded)
    out_ref: (TB, FCp)     f32   item feature (pre-dropout == eval output)
    """
    TB, Lp, KDp = win_ref.shape
    Fp = cw_ref.shape[1]

    # Layout-preserving flatten (Lp is a multiple of the sublane tile).
    win = win_ref[...].reshape(TB * Lp, KDp)

    # Conv2d(1, F, (K, D)) == one deep (TB*Lp, K*D) @ (K*D, Fp) MXU matmul.
    conv = jnp.dot(win, cw_ref[...], preferred_element_type=jnp.float32)
    conv = jnp.maximum(conv + cb_ref[...], 0.0)               # bias + ReLU

    # Global max-pool over the (padded) window axis. Padded rows replicate
    # the last valid window, so no masking is required.
    pooled = jnp.max(conv.reshape(TB, Lp, Fp), axis=1)

    # FC layer (weights pre-transposed in the wrapper; bf16 MXU, f32 acc).
    i_fea = jnp.dot(pooled.astype(fw_ref.dtype), fw_ref[...],
                    preferred_element_type=jnp.float32) + fb_ref[...]
    out_ref[...] = i_fea.astype(out_ref.dtype)


def convmf_forward(item_doc, uids, params, *, tile_b=None):
    """Returns (u_out, i_out) matching the PyTorch module:
       u_out: (B, 1, pmf_dim), i_out: (B, 1, fc_dim)."""
    emb_table = params['item_word_embs']      # (vocab, word_dim)
    conv_w = params['conv_w']                 # (F, 1, K, D)
    conv_b = params['conv_b']                 # (F,)
    fc_w = params['fc_w']                     # (fc_dim, F)
    fc_b = params['fc_b']                     # (fc_dim,)
    user_features = params['user_features']   # (num_users, pmf_dim)

    B, L = item_doc.shape
    Fn, _, K, D = conv_w.shape
    fc_dim = fc_w.shape[0]
    L_out = L - K + 1
    KD = K * D

    KDp = _round_up(KD, LANE)
    Fp = _round_up(Fn, LANE)    # at F=16 this wastes lanes; benign at F~100
    FCp = _round_up(fc_dim, LANE)
    Lp = _round_up(L_out, SUBLANE)

    # Fused embedding gather + im2col: one XLA gather produces the window
    # slab directly (the (B, L, D) embedding is never written to HBM).
    pos = jnp.arange(L_out)[:, None] + jnp.arange(K)[None, :]     # (L_out, K)
    win_ids = item_doc[:, pos]                                    # (B, L_out, K)
    windows = jnp.take(emb_table, win_ids, axis=0)                # (B, L_out, K, D)
    windows = windows.reshape(B, L_out, KD).astype(jnp.bfloat16)
    windows = jnp.pad(windows, ((0, 0), (0, 0), (0, KDp - KD)))   # zero KD lanes
    if Lp > L_out:  # replicate last valid window -> max-pool needs no mask
        windows = jnp.pad(windows, ((0, 0), (0, Lp - L_out), (0, 0)), mode='edge')

    # Pre-transpose + lane-pad weights once (bf16 for the MXU; biases stay f32).
    cw = jnp.transpose(conv_w[:, 0], (1, 2, 0)).reshape(KD, Fn)   # (K*D, F)
    cw = jnp.pad(cw, ((0, KDp - KD), (0, Fp - Fn))).astype(jnp.bfloat16)
    cb = jnp.pad(conv_b, (0, Fp - Fn)).reshape(1, Fp).astype(jnp.float32)
    fw = jnp.pad(fc_w.T, ((0, Fp - Fn), (0, FCp - fc_dim))).astype(jnp.bfloat16)
    fb = jnp.pad(fc_b, (0, FCp - fc_dim)).reshape(1, FCp).astype(jnp.float32)

    # VMEM-budgeted batch tile (per-generation capacity) + scoped-VMEM limit.
    auto_tb, vmem_limit = _select_tile_and_vmem(B, Lp, KDp, Fp, FCp)
    TB = auto_tb if tile_b is None else max(8, _round_up(min(tile_b, B), 8))
    B_pad = _round_up(B, TB)
    if B_pad != B:
        windows = jnp.pad(windows, ((0, B_pad - B), (0, 0), (0, 0)))

    grid = (B_pad // TB,)
    i_fea_pad = pl.pallas_call(
        convmf_item_kernel,
        out_shape=jax.ShapeDtypeStruct((B_pad, FCp), jnp.float32),
        grid=grid,
        in_specs=[
            pl.BlockSpec((TB, Lp, KDp), lambda b: (b, 0, 0)),  # batch-tiled, pipelined
            pl.BlockSpec((KDp, Fp), lambda b: (0, 0)),         # grid-invariant weights
            pl.BlockSpec((1, Fp), lambda b: (0, 0)),
            pl.BlockSpec((Fp, FCp), lambda b: (0, 0)),
            pl.BlockSpec((1, FCp), lambda b: (0, 0)),
        ],
        out_specs=pl.BlockSpec((TB, FCp), lambda b: (b, 0)),
        compiler_params=pltpu.CompilerParams(
            dimension_semantics=("parallel",),
            vmem_limit_bytes=vmem_limit),
    )(windows, cw, cb, fw, fb)

    i_fea = i_fea_pad[:B, :fc_dim]
    u_fea = user_features[uids]               # (B, pmf_dim)
    # torch.stack([x], 1) == x[:, None, :]
    return u_fea[:, None, :], i_fea[:, None, :]


def _reference_forward(item_doc, uids, params):
    """Pure-JAX f32 reference for correctness checking."""
    emb = jnp.take(params['item_word_embs'], item_doc, axis=0)   # (B, L, D)
    cw = params['conv_w'][:, 0, :, :]                            # (F, K, D)
    K = cw.shape[1]
    L = emb.shape[1]
    L_out = L - K + 1
    acc = sum(jnp.einsum('bld,fd->blf', emb[:, k:k + L_out, :], cw[:, k, :])
              for k in range(K))
    conv = jnp.maximum(acc + params['conv_b'][None, None, :], 0.0)
    pooled = jnp.max(conv, axis=1)
    i_fea = pooled @ params['fc_w'].T + params['fc_b'][None, :]
    u_fea = params['user_features'][uids]
    return u_fea[:, None, :], i_fea[:, None, :]


if __name__ == "__main__":
    # Small opt-like configuration implied by the module.
    B = 16            # batch (>=2 grid steps to exercise the pipeline)
    vocab_size = 64
    word_dim = 32     # opt.word_dim
    doc_len = 16      # item_doc sequence length
    kernel_size = 3   # opt.kernel_size
    filters_num = 16  # opt.filters_num
    fc_dim = 32       # opt.fc_dim
    pmf_dim = 32      # PMF user-feature dim
    num_users = 10

    key = jax.random.PRNGKey(0)
    k_emb, k_cw, k_fw, k_uf, k_doc, k_uid = jax.random.split(key, 6)

    # Deterministic synthetic parameters (matches reset_para() shapes/ranges).
    params = {
        # nn.init.uniform_(embedding, -0.1, 0.1)
        'item_word_embs': jax.random.uniform(
            k_emb, (vocab_size, word_dim), jnp.float32, -0.1, 0.1),
        # xavier_normal_ for Conv2d(1, F, (K, D))
        'conv_w': jax.random.normal(
            k_cw, (filters_num, 1, kernel_size, word_dim), jnp.float32)
        * jnp.sqrt(2.0 / (kernel_size * word_dim + filters_num * kernel_size * word_dim)),
        'conv_b': jnp.full((filters_num,), 0.1, jnp.float32),
        # uniform_(-0.1, 0.1) for Linear(F, fc_dim)
        'fc_w': jax.random.uniform(
            k_fw, (fc_dim, filters_num), jnp.float32, -0.1, 0.1),
        'fc_b': jnp.full((fc_dim,), 0.1, jnp.float32),
        # synthetic PMF user features (replaces the .npy checkpoint load)
        'user_features': jax.random.normal(
            k_uf, (num_users, pmf_dim), jnp.float32),
    }

    item_doc = jax.random.randint(k_doc, (B, doc_len), 0, vocab_size)
    uids = jax.random.randint(k_uid, (B,), 0, num_users)

    u_out, i_out = jax.jit(convmf_forward)(item_doc, uids, params)
    jax.block_until_ready((u_out, i_out))

    u_ref, i_ref = _reference_forward(item_doc, uids, params)
    assert u_out.shape == (B, 1, pmf_dim)
    assert i_out.shape == (B, 1, fc_dim)
    assert jnp.allclose(u_out, u_ref, atol=1e-6)
    # bf16 MXU inputs (f32 accumulation) -> loosened tolerance vs pure-f32 ref.
    assert jnp.allclose(i_out, i_ref, atol=2e-2, rtol=2e-2)

    print("KERNEL_OK")
</pallas_src>

<mosaic_0001>
module attributes {stable_mosaic.version = 11 : i64} {
  func.func @convmf_item_kernel(%arg0: i32, %arg1: memref<8x16x128xbf16, #tpu.memory_space<vmem>>, %arg2: memref<128x128xbf16, #tpu.memory_space<vmem>>, %arg3: memref<1x128xf32, #tpu.memory_space<vmem>>, %arg4: memref<128x128xbf16, #tpu.memory_space<vmem>>, %arg5: memref<1x128xf32, #tpu.memory_space<vmem>>, %arg6: memref<8x128xf32, #tpu.memory_space<vmem>>) attributes {dimension_semantics = [#tpu.dimension_semantics<parallel>], iteration_bounds = array<i64: 2>, scalar_prefetch = 0 : i64, scratch_operands = 0 : i64, tpu.core_type = #tpu.core_type<tc>, window_params = [{transform_indices = @transform_0, window_bounds = array<i64: 8, 16, 128>}, {pipeline_mode = #tpu.pipeline_mode<synchronous>, transform_indices = @transform_1, window_bounds = array<i64: 128, 128>}, {pipeline_mode = #tpu.pipeline_mode<synchronous>, transform_indices = @transform_2, window_bounds = array<i64: 1, 128>}, {pipeline_mode = #tpu.pipeline_mode<synchronous>, transform_indices = @transform_3, window_bounds = array<i64: 128, 128>}, {pipeline_mode = #tpu.pipeline_mode<synchronous>, transform_indices = @transform_4, window_bounds = array<i64: 1, 128>}, {transform_indices = @transform_5, window_bounds = array<i64: 8, 128>}]} {
    %c0 = arith.constant 0 : index
    %c0_0 = arith.constant 0 : index
    %c0_1 = arith.constant 0 : index
    %0 = vector.load %arg1[%c0, %c0_0, %c0_1] : memref<8x16x128xbf16, #tpu.memory_space<vmem>>, vector<8x16x128xbf16>
    %1 = vector.shape_cast %0 : vector<8x16x128xbf16> to vector<128x128xbf16>
    %c0_2 = arith.constant 0 : index
    %c0_3 = arith.constant 0 : index
    %2 = vector.load %arg2[%c0_2, %c0_3] : memref<128x128xbf16, #tpu.memory_space<vmem>>, vector<128x128xbf16>
    %cst = arith.constant dense<0.000000e+00> : vector<128x128xf32>
    %3 = tpu.matmul %1, %2, %cst {dimension_numbers = #tpu.dot_dimension_numbers<[1], [0], [0], [1], [0, 0, 1, 1], [], []>} : vector<128x128xbf16>, vector<128x128xbf16>, vector<128x128xf32> -> vector<128x128xf32>
    %c0_4 = arith.constant 0 : index
    %c0_5 = arith.constant 0 : index
    %4 = vector.load %arg3[%c0_4, %c0_5] : memref<1x128xf32, #tpu.memory_space<vmem>>, vector<1x128xf32>
    %5 = vector.broadcast %4 : vector<1x128xf32> to vector<128x128xf32>
    %6 = arith.addf %3, %5 : vector<128x128xf32>
    %cst_6 = arith.constant 0.000000e+00 : f32
    %7 = vector.broadcast %cst_6 : f32 to vector<128x128xf32>
    %8 = arith.maximumf %6, %7 : vector<128x128xf32>
    %9 = vector.shape_cast %8 : vector<128x128xf32> to vector<8x16x128xf32>
    %cst_7 = arith.constant dense<0xFF800000> : vector<8x128xf32>
    %10 = vector.multi_reduction <maximumf>, %9, %cst_7 [1] : vector<8x16x128xf32> to vector<8x128xf32>
    %11 = arith.truncf %10 : vector<8x128xf32> to vector<8x128xbf16>
    %c0_8 = arith.constant 0 : index
    %c0_9 = arith.constant 0 : index
    %12 = vector.load %arg4[%c0_8, %c0_9] : memref<128x128xbf16, #tpu.memory_space<vmem>>, vector<128x128xbf16>
    %cst_10 = arith.constant dense<0.000000e+00> : vector<8x128xf32>
    %13 = tpu.matmul %11, %12, %cst_10 {dimension_numbers = #tpu.dot_dimension_numbers<[1], [0], [0], [1], [0, 0, 1, 1], [], []>} : vector<8x128xbf16>, vector<128x128xbf16>, vector<8x128xf32> -> vector<8x128xf32>
    %c0_11 = arith.constant 0 : index
    %c0_12 = arith.constant 0 : index
    %14 = vector.load %arg5[%c0_11, %c0_12] : memref<1x128xf32, #tpu.memory_space<vmem>>, vector<1x128xf32>
    %15 = vector.broadcast %14 : vector<1x128xf32> to vector<8x128xf32>
    %16 = arith.addf %13, %15 : vector<8x128xf32>
    %c0_13 = arith.constant 0 : index
    %c0_14 = arith.constant 0 : index
    %17 = vector.load %arg6[%c0_13, %c0_14] : memref<8x128xf32, #tpu.memory_space<vmem>>, vector<8x128xf32>
    tpu.vector_store %arg6[%c0_13, %c0_14], %16 {strides = array<i32>} : memref<8x128xf32, #tpu.memory_space<vmem>>, vector<8x128xf32>,
    return
  }
  func.func @transform_0(%arg0: i32) -> (i32, i32, i32) {
    %c0_i32 = arith.constant 0 : i32
    %c0_i32_0 = arith.constant 0 : i32
    %c0_i32_1 = arith.constant 0 : i32
    return %arg0, %c0_i32, %c0_i32_0 : i32, i32, i32
  }
  func.func @transform_1(%arg0: i32) -> (i32, i32) {
    %c0_i32 = arith.constant 0 : i32
    %c0_i32_0 = arith.constant 0 : i32
    %c0_i32_1 = arith.constant 0 : i32
    return %c0_i32, %c0_i32_0 : i32, i32
  }
  func.func @transform_2(%arg0: i32) -> (i32, i32) {
    %c0_i32 = arith.constant 0 : i32
    %c0_i32_0 = arith.constant 0 : i32
    %c0_i32_1 = arith.constant 0 : i32
    return %c0_i32, %c0_i32_0 : i32, i32
  }
  func.func @transform_3(%arg0: i32) -> (i32, i32) {
    %c0_i32 = arith.constant 0 : i32
    %c0_i32_0 = arith.constant 0 : i32
    %c0_i32_1 = arith.constant 0 : i32
    return %c0_i32, %c0_i32_0 : i32, i32
  }
  func.func @transform_4(%arg0: i32) -> (i32, i32) {
    %c0_i32 = arith.constant 0 : i32
    %c0_i32_0 = arith.constant 0 : i32
    %c0_i32_1 = arith.constant 0 : i32
    return %c0_i32, %c0_i32_0 : i32, i32
  }
  func.func @transform_5(%arg0: i32) -> (i32, i32) {
    %c0_i32 = arith.constant 0 : i32
    %c0_i32_0 = arith.constant 0 : i32
    return %arg0, %c0_i32 : i32, i32
  }
}

</mosaic_0001>

<llo_original>
// kernel: convmf_forward.1
$region0: #{convmf_forward.1}
  #allocation0 [shape = 'u32[]', space=smem, size = 0x4, offset = 0x4, fixed_abs, tag = 'smem constant byte address 0x4 - core index']
  #allocation1 [shape = 'u32[144,128]{1,0:T(1,128)}', space=vmem, size = 0x12000, scoped, tag = 'internal scratch']
  %s0 = inlined_call_operand.vmem [shape: bf16[16,16,128], index: 0, kind: input, shape index: {}]
  %s1 = inlined_call_operand.vmem [shape: bf16[128,128], index: 1, kind: input, shape index: {}]
  %s2 = inlined_call_operand.vmem [shape: f32[1,128], index: 2, kind: input, shape index: {}]
  %s3 = inlined_call_operand.vmem [shape: bf16[128,128], index: 3, kind: input, shape index: {}]
  %s4 = inlined_call_operand.vmem [shape: f32[1,128], index: 4, kind: input, shape index: {}]
  %s5 = inlined_call_operand.hbm [shape: f32[16,128], index: 5, kind: output, shape index: {}]
  %s6 = sld [smem:[#allocation0]]
  $region53: #{convmf_forward.1} parent=0
    _
  %s8 = ssub.s32 1, %s6
  %s9 = scalar_select 0, %s8, %s6
  $region1: #{convmf_forward.1} parent=0
    #allocation2 [shape = 'u8[8192]{0}', space=vmem, size = 0x2000, scoped, tag = 'output window, operand 0']
    #allocation3 [shape = 's32[2]{0}', space=sflag, size = 0x8, scoped, tag = 'scoped memory for convmf_forward.1']
    %10 = vsyncpa [#allocation3], 0
    %s11 = scalar_lea.sflag [#allocation3], 1
    %12 = vsyncpa %s11, 0
    loop: start=0, step=1, limit=4
    $region2: #{convmf_forward.1} parent=1 // loop_pre_header
      _
    $region3: #{convmf_forward.1} parent=1 // loop_header
      %s14 = sphi 0, %s18
      %p15 = scmp.ge.s32.totalorder %s14, 4
      %s24 = sphi 0, %s26
      %s27 = sphi 0, %s24
      %s28 = sphi 0, %s27
      %s44 = sphi 0, %s28
      %s48 = sphi 0, %s48
      %s50 = sphi 0, %s48
      %s51 = sphi 0, %s50
      %s65 = sphi 0, %s51
      %s69 = sphi 0, %s69
      %s71 = sphi 0, %s69
      %s72 = sphi 0, %s71
      %s86 = sphi 0, %s72
      %s90 = sphi 0, %s90
      %s92 = sphi 0, %s90
      %s93 = sphi 0, %s92
      %s107 = sphi 0, %s93
      %s111 = sphi 0, %s111
      %s113 = sphi 0, %s111
      %s114 = sphi 0, %s113
      %s128 = sphi 0, %s114
      %s134 = sphi 0, %s136
      %s137 = sphi 0, %s134
      %s138 = sphi 0, %s137
      %s154 = sphi 0, %s138
    $region4: #{convmf_forward.1} parent=1 // loop_header_branch
      %17 = sbr.rel (%p15) target = $region8
    $region5: #{convmf_forward.1} parent=1 // loop_body
      %s19 = ssub.s32 %s14, 1
      %s20 = ssub.s32 %s14, 2
      %s21 = sadd.s32 %s14, 1
      %s22 = ssub.s32 %s14, %s21
      %p23 = scmp.eq.s32.totalorder %s22, 0
      %s25 = sadd.s32 %s24, 1
      %s26 = scalar_select %p23, %s24, %s25
      %p29 = pneg %p23
      %p30 = scmp.eq.s32.totalorder %s14, 1
      %p31 = por %p29, %p30
      %p32 = scmp.ne.s32.totalorder %s24, %s27
      %p33 = scmp.eq.s32.totalorder %s14, 0
      %p34 = por %p32, %p33
      %p35 = scmp.ne.s32.totalorder %s24, %s27
      %p36 = scmp.eq.s32.totalorder %s19, 1
      %p37 = por %p35, %p36
      %p38 = scmp.ne.s32.totalorder %s27, %s28
      %p39 = scmp.eq.s32.totalorder %s19, 0
      %p40 = por %p38, %p39
      %p41 = scmp.ne.s32.totalorder %s27, %s28
      %p42 = scmp.eq.s32.totalorder %s20, 1
      %p43 = por %p41, %p42
      %p45 = scmp.ne.s32.totalorder %s28, %s44
      %p46 = scmp.eq.s32.totalorder %s20, 0
      %p47 = por %p45, %p46
      %s49 = sadd.s32 %s48, 1
      %p52 = scmp.eq.s32.totalorder %s14, 1
      %p53 = scmp.ne.s32.totalorder %s48, %s50
      %p54 = scmp.eq.s32.totalorder %s14, 0
      %p55 = por %p53, %p54
      %p56 = scmp.ne.s32.totalorder %s48, %s50
      %p57 = scmp.eq.s32.totalorder %s19, 1
      %p58 = por %p56, %p57
      %p59 = scmp.ne.s32.totalorder %s50, %s51
      %p60 = scmp.eq.s32.totalorder %s19, 0
      %p61 = por %p59, %p60
      %p62 = scmp.ne.s32.totalorder %s50, %s51
      %p63 = scmp.eq.s32.totalorder %s20, 1
      %p64 = por %p62, %p63
      %p66 = scmp.ne.s32.totalorder %s51, %s65
      %p67 = scmp.eq.s32.totalorder %s20, 0
      %p68 = por %p66, %p67
      %s70 = sadd.s32 %s69, 1
      %p73 = scmp.eq.s32.totalorder %s14, 1
      %p74 = scmp.ne.s32.totalorder %s69, %s71
      %p75 = scmp.eq.s32.totalorder %s14, 0
      %p76 = por %p74, %p75
      %p77 = scmp.ne.s32.totalorder %s69, %s71
      %p78 = scmp.eq.s32.totalorder %s19, 1
      %p79 = por %p77, %p78
      %p80 = scmp.ne.s32.totalorder %s71, %s72
      %p81 = scmp.eq.s32.totalorder %s19, 0
      %p82 = por %p80, %p81
      %p83 = scmp.ne.s32.totalorder %s71, %s72
      %p84 = scmp.eq.s32.totalorder %s20, 1
      %p85 = por %p83, %p84
      %p87 = scmp.ne.s32.totalorder %s72, %s86
      %p88 = scmp.eq.s32.totalorder %s20, 0
      %p89 = por %p87, %p88
      %s91 = sadd.s32 %s90, 1
      %p94 = scmp.eq.s32.totalorder %s14, 1
      %p95 = scmp.ne.s32.totalorder %s90, %s92
      %p96 = scmp.eq.s32.totalorder %s14, 0
      %p97 = por %p95, %p96
      %p98 = scmp.ne.s32.totalorder %s90, %s92
      %p99 = scmp.eq.s32.totalorder %s19, 1
      %p100 = por %p98, %p99
      %p101 = scmp.ne.s32.totalorder %s92, %s93
      %p102 = scmp.eq.s32.totalorder %s19, 0
      %p103 = por %p101, %p102
      %p104 = scmp.ne.s32.totalorder %s92, %s93
      %p105 = scmp.eq.s32.totalorder %s20, 1
      %p106 = por %p104, %p105
      %p108 = scmp.ne.s32.totalorder %s93, %s107
      %p109 = scmp.eq.s32.totalorder %s20, 0
      %p110 = por %p108, %p109
      %s112 = sadd.s32 %s111, 1
      %p115 = scmp.eq.s32.totalorder %s14, 1
      %p116 = scmp.ne.s32.totalorder %s111, %s113
      %p117 = scmp.eq.s32.totalorder %s14, 0
      %p118 = por %p116, %p117
      %p119 = scmp.ne.s32.totalorder %s111, %s113
      %p120 = scmp.eq.s32.totalorder %s19, 1
      %p121 = por %p119, %p120
      %p122 = scmp.ne.s32.totalorder %s113, %s114
      %p123 = scmp.eq.s32.totalorder %s19, 0
      %p124 = por %p122, %p123
      %p125 = scmp.ne.s32.totalorder %s113, %s114
      %p126 = scmp.eq.s32.totalorder %s20, 1
      %p127 = por %p125, %p126
      %p129 = scmp.ne.s32.totalorder %s114, %s128
      %p130 = scmp.eq.s32.totalorder %s20, 0
      %p131 = por %p129, %p130
      %s132 = ssub.s32 %s14, %s21
      %p133 = scmp.eq.s32.totalorder %s132, 0
      %s135 = sadd.s32 %s134, 1
      %s136 = scalar_select %p133, %s134, %s135
      %p139 = pneg %p133
      %p140 = scmp.eq.s32.totalorder %s14, 1
      %p141 = por %p139, %p140
      %p142 = scmp.ne.s32.totalorder %s134, %s137
      %p143 = scmp.eq.s32.totalorder %s14, 0
      %p144 = por %p142, %p143
      %p145 = scmp.ne.s32.totalorder %s134, %s137
      %p146 = scmp.eq.s32.totalorder %s19, 1
      %p147 = por %p145, %p146
      %p148 = scmp.ne.s32.totalorder %s137, %s138
      %p149 = scmp.eq.s32.totalorder %s19, 0
      %p150 = por %p148, %p149
      %p151 = scmp.ne.s32.totalorder %s137, %s138
      %p152 = scmp.eq.s32.totalorder %s20, 1
      %p153 = por %p151, %p152
      %p155 = scmp.ne.s32.totalorder %s138, %s154
      %p156 = scmp.eq.s32.totalorder %s20, 0
      %p157 = por %p155, %p156
      %p158 = scmp.le.s32.totalorder 1, %s14
      %p159 = scmp.lt.s32.totalorder %s14, 3
      %p160 = pnand %p158, %p159
      %p161 = pneg %p160
      // Predicated region
      $region9: #{convmf_forward.1} parent=5 // pred_check
        _
      $region10: #{convmf_forward.1} parent=5 // pred_check_branch
        %163 = sbr.rel (%p160) target = $region12
      $region11: #{convmf_forward.1} parent=5 // pred_region
        %s164 = ssub.s32 %s14, 1
        // Predicated region
        $region13: #{convmf_forward.1} parent=11 // pred_check
          %p165 = pneg %p61
        $region14: #{convmf_forward.1} parent=11 // pred_check_branch
          %167 = sbr.rel (%p165) target = $region16
        $region15: #{convmf_forward.1} parent=11 // pred_region
          _
        $region16: #{convmf_forward.1} parent=11 // pred_fallthru
          _
        // Predicated region
        $region17: #{convmf_forward.1} parent=11 // pred_check
          %p168 = pneg %p82
        $region18: #{convmf_forward.1} parent=11 // pred_check_branch
          %170 = sbr.rel (%p168) target = $region20
        $region19: #{convmf_forward.1} parent=11 // pred_region
          _
        $region20: #{convmf_forward.1} parent=11 // pred_fallthru
          _
        // Predicated region
        $region21: #{convmf_forward.1} parent=11 // pred_check
          %p171 = pneg %p103
        $region22: #{convmf_forward.1} parent=11 // pred_check_branch
          %173 = sbr.rel (%p171) target = $region24
        $region23: #{convmf_forward.1} parent=11 // pred_region
          _
        $region24: #{convmf_forward.1} parent=11 // pred_fallthru
          _
        // Predicated region
        $region25: #{convmf_forward.1} parent=11 // pred_check
          %p174 = pneg %p124
        $region26: #{convmf_forward.1} parent=11 // pred_check_branch
          %176 = sbr.rel (%p174) target = $region28
        $region27: #{convmf_forward.1} parent=11 // pred_region
          _
        $region28: #{convmf_forward.1} parent=11 // pred_fallthru
          _
      $region12: #{convmf_forward.1} parent=5 // pred_fallthru
        _
      %p177 = scmp.lt.s32.totalorder %s14, 2
      // Predicated region
      $region29: #{convmf_forward.1} parent=5 // pred_check
        %p178 = pneg %p177
      $region30: #{convmf_forward.1} parent=5 // pred_check_branch
        %180 = sbr.rel (%p178) target = $region32
      $region31: #{convmf_forward.1} parent=5 // pred_region
        // Predicated region
        $region33: #{convmf_forward.1} parent=31 // pred_check
          %p181 = pneg %p34
        $region34: #{convmf_forward.1} parent=31 // pred_check_branch
          %183 = sbr.rel (%p181) target = $region36
        $region35: #{convmf_forward.1} parent=31 // pred_region
          %s184 = smul.u32 8, %s14
          %p185 = scmp.lt.s32.totalorder %s184, 15
          %s186 = scalar_select %p185, %s184, 15
          %s187 = smul.addr %s186, 2
          %s188 = smul.addr %s187, 4
          %s189 = scalar_lea.vmem %s0, %s188
          %s190 = smul.u32 8, %s14
        $region36: #{convmf_forward.1} parent=31 // pred_fallthru
          _
      $region32: #{convmf_forward.1} parent=5 // pred_fallthru
        _
      %p191 = scmp.le.s32.totalorder 1, %s14
      %p192 = scmp.lt.s32.totalorder %s14, 3
      %p193 = pnand %p191, %p192
      %p194 = pneg %p193
      // Predicated region
      $region37: #{convmf_forward.1} parent=5 // pred_check
        _
      $region38: #{convmf_forward.1} parent=5 // pred_check_branch
        %196 = sbr.rel (%p193) target = $region40
      $region39: #{convmf_forward.1} parent=5 // pred_region
        %s197 = ssub.s32 %s14, 1
        %s198 = smul.u32 8, %s19
        %p199 = scmp.lt.s32.totalorder %s198, 15
        %s200 = scalar_select %p199, %s198, 15
        %s201 = smul.addr %s200, 2
        %s202 = smul.addr %s201, 4
        %s203 = scalar_lea.vmem %s0, %s202
        %p204 = pneg %p40
        %p205 = pneg %p37
        %p206 = pneg %p61
        %p207 = pneg %p58
        %p208 = pneg %p82
        %p209 = pneg %p79
        %p210 = pneg %p103
        %p211 = pneg %p100
        %p212 = pneg %p124
        %p213 = pneg %p121
        %p214 = pneg %p150
        %p215 = pneg %p147
        %s216 = sand.u32 %s137, 1
        %s217 = scalar_lea.sflag [#allocation3], %s216
        %s218 = sand.u32 %s137, 1
        %s219 = smul.addr %s218, 8
        %s220 = scalar_lea.vmem [#allocation2], %s219
        %s221 = smul.u32 8, %s19
        %p222 = scmp.lt.s32.totalorder %s221, 15
        %s223 = scalar_select %p222, %s221, 15
        %s224 = smul.addr %s223, 2
        %s225 = smul.addr %s224, 4
        %s226 = scalar_lea.vmem %s0, %s225
        %s227 = smul.u32 8, %s19
        %v229 = vld [vmem:[%s226] sm:$0xf]
        %v230 = vld [vmem:[%s226 + $0x4] sm:$0xf]
        %v231 = vld [vmem:[%s226 + $0x8] sm:$0xf]
        %v232 = vld [vmem:[%s226 + $0xc] sm:$0xf]
        %v233 = vld [vmem:[%s226 + $0x10] sm:$0xf]
        %v234 = vld [vmem:[%s226 + $0x14] sm:$0xf]
        %v235 = vld [vmem:[%s226 + $0x18] sm:$0xf]
        %v236 = vld [vmem:[%s226 + $0x1c] sm:$0xf]
        %v237 = vld [vmem:[%s226 + $0x20] sm:$0xf]
        %v238 = vld [vmem:[%s226 + $0x24] sm:$0xf]
        %v239 = vld [vmem:[%s226 + $0x28] sm:$0xf]
        %v240 = vld [vmem:[%s226 + $0x2c] sm:$0xf]
        %v241 = vld [vmem:[%s226 + $0x30] sm:$0xf]
        %v242 = vld [vmem:[%s226 + $0x34] sm:$0xf]
        %v243 = vld [vmem:[%s226 + $0x38] sm:$0xf]
        %v244 = vld [vmem:[%s226 + $0x3c] sm:$0xf]
        %v245 = vld [vmem:[%s1] sm:$0xf]
        %v246 = vld [vmem:[%s1 + $0x4] sm:$0xf]
        %v247 = vld [vmem:[%s1 + $0x8] sm:$0xf]
        %v248 = vld [vmem:[%s1 + $0xc] sm:$0xf]
        %v249 = vld [vmem:[%s1 + $0x10] sm:$0xf]
        %v250 = vld [vmem:[%s1 + $0x14] sm:$0xf]
        %v251 = vld [vmem:[%s1 + $0x18] sm:$0xf]
        %v252 = vld [vmem:[%s1 + $0x1c] sm:$0xf]
        %v253 = vld [vmem:[%s1 + $0x20] sm:$0xf]
        %v254 = vld [vmem:[%s1 + $0x24] sm:$0xf]
        %v255 = vld [vmem:[%s1 + $0x28] sm:$0xf]
        %v256 = vld [vmem:[%s1 + $0x2c] sm:$0xf]
        %v257 = vld [vmem:[%s1 + $0x30] sm:$0xf]
        %v258 = vld [vmem:[%s1 + $0x34] sm:$0xf]
        %v259 = vld [vmem:[%s1 + $0x38] sm:$0xf]
        %v260 = vld [vmem:[%s1 + $0x3c] sm:$0xf]
        %v261 = vld [vmem:[%s2] sm:$0x1]
        %v263 = vlaneseq
        %v264 = vshrl.u32 %v263, 7
        %v265 = vsub.s32 0, %v264
        %v266 = vrot.slane %v261, %v265
        %v284 = vunpack.c.l.b16 %v229
        %v285 = vunpack.c.l.b16 %v230
        %v286 = vunpack.c.l.b16 %v231
        %v287 = vunpack.c.l.b16 %v232
        %v288 = vunpack.c.l.b16 %v233
        %v289 = vunpack.c.l.b16 %v234
        %v290 = vunpack.c.l.b16 %v235
        %v291 = vunpack.c.l.b16 %v236
        %v292 = vunpack.c.l.b16 %v237
        %v293 = vunpack.c.l.b16 %v238
        %v294 = vunpack.c.l.b16 %v239
        %v295 = vunpack.c.l.b16 %v240
        %v296 = vunpack.c.l.b16 %v241
        %v297 = vunpack.c.l.b16 %v242
        %v298 = vunpack.c.l.b16 %v243
        %v299 = vunpack.c.l.b16 %v244
        %v300 = vpack.c.b16 %v285, %v284
        %v301 = vpack.c.b16 %v287, %v286
        %v302 = vpack.c.b16 %v289, %v288
        %v303 = vpack.c.b16 %v291, %v290
        %v304 = vpack.c.b16 %v293, %v292
        %v305 = vpack.c.b16 %v295, %v294
        %v306 = vpack.c.b16 %v297, %v296
        %v307 = vpack.c.b16 %v299, %v298
        %v332 = vunpack.c.l.b16 %v245
        %v333 = vunpack.c.l.b16 %v246
        %v334 = vunpack.c.l.b16 %v247
        %v335 = vunpack.c.l.b16 %v248
        %v336 = vunpack.c.l.b16 %v249
        %v337 = vunpack.c.l.b16 %v250
        %v338 = vunpack.c.l.b16 %v251
        %v339 = vunpack.c.l.b16 %v252
        %v340 = vunpack.c.l.b16 %v253
        %v341 = vunpack.c.l.b16 %v254
        %v342 = vunpack.c.l.b16 %v255
        %v343 = vunpack.c.l.b16 %v256
        %v344 = vunpack.c.l.b16 %v257
        %v345 = vunpack.c.l.b16 %v258
        %v346 = vunpack.c.l.b16 %v259
        %v347 = vunpack.c.l.b16 %v260
        %v348 = vpack.c.b16 %v333, %v332
        %v349 = vpack.c.b16 %v335, %v334
        %v350 = vpack.c.b16 %v337, %v336
        %v351 = vpack.c.b16 %v339, %v338
        %v352 = vpack.c.b16 %v341, %v340
        %v353 = vpack.c.b16 %v343, %v342
        %v354 = vpack.c.b16 %v345, %v344
        %v355 = vpack.c.b16 %v347, %v346
        %364 = vmatprep.subr.bf16.mxu0 0
        %365 = vmatpush1.bf16.msra.mxu0 %v348
        %366 = vmatprep.subr.bf16.mxu0 0
        %367 = vmatpush1.bf16.msra.mxu0 %v349
        %368 = vmatprep.subr.bf16.mxu0 0
        %369 = vmatpush1.bf16.msra.mxu0 %v350
        %370 = vmatprep.subr.bf16.mxu0 0
        %371 = vmatpush1.bf16.msra.mxu0 %v351
        %372 = vmatprep.subr.bf16.mxu0 0
        %373 = vmatpush1.bf16.msra.mxu0 %v352
        %374 = vmatprep.subr.bf16.mxu0 0
        %375 = vmatpush1.bf16.msra.mxu0 %v353
        %376 = vmatprep.subr.bf16.mxu0 0
        %377 = vmatpush1.bf16.msra.mxu0 %v354
        %378 = vmatprep.subr.bf16.mxu0 0
        %379 = vmatpush1.bf16.msra.mxu0 %v355
        %380 = vmatprep.subr.bf16.mxu0 0
        %381 = vmatpush1.bf16.msra.mxu0 0
        %382 = vmatprep.subr.bf16.mxu0 0
        %383 = vmatpush1.bf16.msra.mxu0 0
        %384 = vmatprep.subr.bf16.mxu0 0
        %385 = vmatpush1.bf16.msra.mxu0 0
        %386 = vmatprep.subr.bf16.mxu0 0
        %387 = vmatpush1.bf16.msra.mxu0 0
        %388 = vmatprep.subr.bf16.mxu0 0
        %389 = vmatpush1.bf16.msra.mxu0 0
        %390 = vmatprep.subr.bf16.mxu0 0
        %391 = vmatpush1.bf16.msra.mxu0 0
        %392 = vmatprep.subr.bf16.mxu0 0
        %393 = vmatpush1.bf16.msra.mxu0 0
        %394 = vmatprep.subr.bf16.mxu0 0
        %395 = vmatpush1.bf16.msra.mxu0 0
        %396 = vmatprep.mubr.bf16.mxu0 0
        %397 = vmatmul.mubr.bf16.gmra.mrb[0].mxu0 %v300
        %v398 = vpop.f32.mrb[0].mxu0
        %v399 = vadd.f32 %v266, %v398
        %v400 = vpop.f32.mrb[0].mxu0
        %v401 = vpop.f32.mrb[0].mxu0
        %v402 = vadd.f32 %v266, %v401
        %v403 = vpop.f32.mrb[0].mxu0
        %404 = vmatprep.mubr.bf16.mxu0 0
        %405 = vmatmul.mubr.bf16.gmra.mrb[0].mxu0 %v301
        %v406 = vpop.f32.mrb[0].mxu0
        %v407 = vadd.f32 %v266, %v406
        %v408 = vpop.f32.mrb[0].mxu0
        %v409 = vpop.f32.mrb[0].mxu0
        %v410 = vadd.f32 %v266, %v409
        %v411 = vpop.f32.mrb[0].mxu0
        %412 = vmatprep.mubr.bf16.mxu0 0
        %413 = vmatmul.mubr.bf16.gmra.mrb[0].mxu0 %v302
        %v414 = vpop.f32.mrb[0].mxu0
        %v415 = vadd.f32 %v266, %v414
        %v416 = vpop.f32.mrb[0].mxu0
        %v417 = vpop.f32.mrb[0].mxu0
        %v418 = vadd.f32 %v266, %v417
        %v419 = vpop.f32.mrb[0].mxu0
        %420 = vmatprep.mubr.bf16.mxu0 0
        %421 = vmatmul.mubr.bf16.gmra.mrb[0].mxu0 %v303
        %v422 = vpop.f32.mrb[0].mxu0
        %v423 = vadd.f32 %v266, %v422
        %v424 = vpop.f32.mrb[0].mxu0
        %v425 = vpop.f32.mrb[0].mxu0
        %v426 = vadd.f32 %v266, %v425
        %v427 = vpop.f32.mrb[0].mxu0
        %428 = vmatprep.mubr.bf16.mxu0 0
        %429 = vmatmul.mubr.bf16.gmra.mrb[0].mxu0 %v304
        %v430 = vpop.f32.mrb[0].mxu0
        %v431 = vadd.f32 %v266, %v430
        %v432 = vpop.f32.mrb[0].mxu0
        %v433 = vpop.f32.mrb[0].mxu0
        %v434 = vadd.f32 %v266, %v433
        %v435 = vpop.f32.mrb[0].mxu0
        %436 = vmatprep.mubr.bf16.mxu0 0
        %437 = vmatmul.mubr.bf16.gmra.mrb[0].mxu0 %v305
        %v438 = vpop.f32.mrb[0].mxu0
        %v439 = vadd.f32 %v266, %v438
        %v440 = vpop.f32.mrb[0].mxu0
        %v441 = vpop.f32.mrb[0].mxu0
        %v442 = vadd.f32 %v266, %v441
        %v443 = vpop.f32.mrb[0].mxu0
        %444 = vmatprep.mubr.bf16.mxu0 0
        %445 = vmatmul.mubr.bf16.gmra.mrb[0].mxu0 %v306
        %v446 = vpop.f32.mrb[0].mxu0
        %v447 = vadd.f32 %v266, %v446
        %v448 = vpop.f32.mrb[0].mxu0
        %v449 = vpop.f32.mrb[0].mxu0
        %v450 = vadd.f32 %v266, %v449
        %v451 = vpop.f32.mrb[0].mxu0
        %452 = vmatprep.mubr.bf16.mxu0 0
        %453 = vmatmul.mubr.bf16.gmra.mrb[0].mxu0 %v307
        %v454 = vpop.f32.mrb[0].mxu0
        %v455 = vadd.f32 %v266, %v454
        %v456 = vpop.f32.mrb[0].mxu0
        %v457 = vpop.f32.mrb[0].mxu0
        %v458 = vadd.f32 %v266, %v457
        %v459 = vpop.f32.mrb[0].mxu0
        %460 = vdwg.mxu0
        %v461 = vmax.f32 %v399, 0.0
        %v462 = vmax.f32 %v402, 0.0
        %v463 = vmax.f32 %v407, 0.0
        %v464 = vmax.f32 %v410, 0.0
        %v465 = vmax.f32 %v415, 0.0
        %v466 = vmax.f32 %v418, 0.0
        %v467 = vmax.f32 %v423, 0.0
        %v468 = vmax.f32 %v426, 0.0
        %v469 = vmax.f32 %v431, 0.0
        %v470 = vmax.f32 %v434, 0.0
        %v471 = vmax.f32 %v439, 0.0
        %v472 = vmax.f32 %v442, 0.0
        %v473 = vmax.f32 %v447, 0.0
        %v474 = vmax.f32 %v450, 0.0
        %v475 = vmax.f32 %v455, 0.0
        %v476 = vmax.f32 %v458, 0.0
        %v477 = vmax.f32 %v461, %v462
        %v478 = vrot.slane %v477, 4
        %v479 = vmax.f32 %v477, %v478
        %v480 = vrot.slane %v479, 2
        %v481 = vmax.f32 %v479, %v480
        %v482 = vrot.slane %v481, 1
        %v483 = vmax.f32 %v481, %v482
        %v484 = vmax.f32 %v463, %v464
        %v485 = vrot.slane %v484, 4
        %v486 = vmax.f32 %v484, %v485
        %v487 = vrot.slane %v486, 2
        %v488 = vmax.f32 %v486, %v487
        %v489 = vrot.slane %v488, 1
        %v490 = vmax.f32 %v488, %v489
        %v491 = vmax.f32 %v465, %v466
        %v492 = vrot.slane %v491, 4
        %v493 = vmax.f32 %v491, %v492
        %v494 = vrot.slane %v493, 2
        %v495 = vmax.f32 %v493, %v494
        %v496 = vrot.slane %v495, 1
        %v497 = vmax.f32 %v495, %v496
        %v498 = vmax.f32 %v467, %v468
        %v499 = vrot.slane %v498, 4
        %v500 = vmax.f32 %v498, %v499
        %v501 = vrot.slane %v500, 2
        %v502 = vmax.f32 %v500, %v501
        %v503 = vrot.slane %v502, 1
        %v504 = vmax.f32 %v502, %v503
        %v505 = vmax.f32 %v469, %v470
        %v506 = vrot.slane %v505, 4
        %v507 = vmax.f32 %v505, %v506
        %v508 = vrot.slane %v507, 2
        %v509 = vmax.f32 %v507, %v508
        %v510 = vrot.slane %v509, 1
        %v511 = vmax.f32 %v509, %v510
        %v512 = vmax.f32 %v471, %v472
        %v513 = vrot.slane %v512, 4
        %v514 = vmax.f32 %v512, %v513
        %v515 = vrot.slane %v514, 2
        %v516 = vmax.f32 %v514, %v515
        %v517 = vrot.slane %v516, 1
        %v518 = vmax.f32 %v516, %v517
        %v519 = vmax.f32 %v473, %v474
        %v520 = vrot.slane %v519, 4
        %v521 = vmax.f32 %v519, %v520
        %v522 = vrot.slane %v521, 2
        %v523 = vmax.f32 %v521, %v522
        %v524 = vrot.slane %v523, 1
        %v525 = vmax.f32 %v523, %v524
        %v526 = vmax.f32 %v475, %v476
        %v527 = vrot.slane %v526, 4
        %v528 = vmax.f32 %v526, %v527
        %v529 = vrot.slane %v528, 2
        %v530 = vmax.f32 %v528, %v529
        %v531 = vrot.slane %v530, 1
        %v532 = vmax.f32 %v530, %v531
        %v533 = vpack.c.bf16 %v483, %v483
        %v534 = vpack.c.bf16 %v490, %v490
        %v535 = vpack.c.bf16 %v497, %v497
        %v536 = vpack.c.bf16 %v504, %v504
        %v537 = vpack.c.bf16 %v511, %v511
        %v538 = vpack.c.bf16 %v518, %v518
        %v539 = vpack.c.bf16 %v525, %v525
        %v540 = vpack.c.bf16 %v532, %v532
        %v541 = vld [vmem:[%s3] sm:$0xf]
        %v542 = vld [vmem:[%s3 + $0x4] sm:$0xf]
        %v543 = vld [vmem:[%s3 + $0x8] sm:$0xf]
        %v544 = vld [vmem:[%s3 + $0xc] sm:$0xf]
        %v545 = vld [vmem:[%s3 + $0x10] sm:$0xf]
        %v546 = vld [vmem:[%s3 + $0x14] sm:$0xf]
        %v547 = vld [vmem:[%s3 + $0x18] sm:$0xf]
        %v548 = vld [vmem:[%s3 + $0x1c] sm:$0xf]
        %v549 = vld [vmem:[%s3 + $0x20] sm:$0xf]
        %v550 = vld [vmem:[%s3 + $0x24] sm:$0xf]
        %v551 = vld [vmem:[%s3 + $0x28] sm:$0xf]
        %v552 = vld [vmem:[%s3 + $0x2c] sm:$0xf]
        %v553 = vld [vmem:[%s3 + $0x30] sm:$0xf]
        %v554 = vld [vmem:[%s3 + $0x34] sm:$0xf]
        %v555 = vld [vmem:[%s3 + $0x38] sm:$0xf]
        %v556 = vld [vmem:[%s3 + $0x3c] sm:$0xf]
        %v557 = vld [vmem:[%s4] sm:$0x1]
        %v559 = vlaneseq
        %v560 = vshrl.u32 %v559, 7
        %v561 = vsub.s32 0, %v560
        %v562 = vrot.slane %v557, %v561
        %v572 = vunpack.c.l.b16 %v533
        %v573 = vunpack.c.l.b16 %v534
        %v574 = vunpack.c.l.b16 %v535
        %v575 = vunpack.c.l.b16 %v536
        %v576 = vunpack.c.l.b16 %v537
        %v577 = vunpack.c.l.b16 %v538
        %v578 = vunpack.c.l.b16 %v539
        %v579 = vunpack.c.l.b16 %v540
        %vm580 = vcmask 1041409
        %v581 = vsel %vm580, %v573, %v572
        %vm582 = vcmask 1042434
        %v583 = vsel %vm582, %v574, %v581
        %vm584 = vcmask 1043459
        %v585 = vsel %vm584, %v575, %v583
        %vm586 = vcmask 1044484
        %v587 = vsel %vm586, %v576, %v585
        %vm588 = vcmask 1045509
        %v589 = vsel %vm588, %v577, %v587
        %vm590 = vcmask 1046534
        %v591 = vsel %vm590, %v578, %v589
        %vm592 = vcmask 1047559
        %v593 = vsel %vm592, %v579, %v591
        %v594 = vpack.c.b16 %v593, %v593
        %v612 = vunpack.c.l.b16 %v541
        %v613 = vunpack.c.l.b16 %v542
        %v614 = vunpack.c.l.b16 %v543
        %v615 = vunpack.c.l.b16 %v544
        %v616 = vunpack.c.l.b16 %v545
        %v617 = vunpack.c.l.b16 %v546
        %v618 = vunpack.c.l.b16 %v547
        %v619 = vunpack.c.l.b16 %v548
        %v620 = vunpack.c.l.b16 %v549
        %v621 = vunpack.c.l.b16 %v550
        %v622 = vunpack.c.l.b16 %v551
        %v623 = vunpack.c.l.b16 %v552
        %v624 = vunpack.c.l.b16 %v553
        %v625 = vunpack.c.l.b16 %v554
        %v626 = vunpack.c.l.b16 %v555
        %v627 = vunpack.c.l.b16 %v556
        %v628 = vpack.c.b16 %v613, %v612
        %v629 = vpack.c.b16 %v615, %v614
        %v630 = vpack.c.b16 %v617, %v616
        %v631 = vpack.c.b16 %v619, %v618
        %v632 = vpack.c.b16 %v621, %v620
        %v633 = vpack.c.b16 %v623, %v622
        %v634 = vpack.c.b16 %v625, %v624
        %v635 = vpack.c.b16 %v627, %v626
        %644 = vmatprep.subr.bf16.mxu0 0
        %645 = vmatpush1.bf16.msra.mxu0 %v628
        %646 = vmatprep.subr.bf16.mxu0 0
        %647 = vmatpush1.bf16.msra.mxu0 %v629
        %648 = vmatprep.subr.bf16.mxu0 0
        %649 = vmatpush1.bf16.msra.mxu0 %v630
        %650 = vmatprep.subr.bf16.mxu0 0
        %651 = vmatpush1.bf16.msra.mxu0 %v631
        %652 = vmatprep.subr.bf16.mxu0 0
        %653 = vmatpush1.bf16.msra.mxu0 %v632
        %654 = vmatprep.subr.bf16.mxu0 0
        %655 = vmatpush1.bf16.msra.mxu0 %v633
        %656 = vmatprep.subr.bf16.mxu0 0
        %657 = vmatpush1.bf16.msra.mxu0 %v634
        %658 = vmatprep.subr.bf16.mxu0 0
        %659 = vmatpush1.bf16.msra.mxu0 %v635
        %660 = vmatprep.subr.bf16.mxu0 0
        %661 = vmatpush1.bf16.msra.mxu0 0
        %662 = vmatprep.subr.bf16.mxu0 0
        %663 = vmatpush1.bf16.msra.mxu0 0
        %664 = vmatprep.subr.bf16.mxu0 0
        %665 = vmatpush1.bf16.msra.mxu0 0
        %666 = vmatprep.subr.bf16.mxu0 0
        %667 = vmatpush1.bf16.msra.mxu0 0
        %668 = vmatprep.subr.bf16.mxu0 0
        %669 = vmatpush1.bf16.msra.mxu0 0
        %670 = vmatprep.subr.bf16.mxu0 0
        %671 = vmatpush1.bf16.msra.mxu0 0
        %672 = vmatprep.subr.bf16.mxu0 0
        %673 = vmatpush1.bf16.msra.mxu0 0
        %674 = vmatprep.subr.bf16.mxu0 0
        %675 = vmatpush1.bf16.msra.mxu0 0
        %676 = vmatprep.mubr.bf16.mxu0 0
        %677 = vmatmul.mubr.bf16.gmra.mrb[0].mxu0 %v594
        %v678 = vpop.f32.mrb[0].mxu0
        %v679 = vadd.f32 %v562, %v678
        %v680 = vpop.f32.mrb[0].mxu0
        %v681 = vpop.f32.mrb[0].mxu0
        %v682 = vpop.f32.mrb[0].mxu0
        %683 = vdwg.mxu0
        %684 = vst [vmem:[%s220] sm:$0xff] %v679
        %s685 = sand.u32 %s137, 1
        %s686 = scalar_lea.sflag [#allocation3], %s685
        %s687 = sand.u32 %s137, 1
        %s688 = smul.addr %s687, 8
        %s689 = scalar_lea.vmem [#allocation2], %s688
        // Predicated region
        $region41: #{convmf_forward.1} parent=39 // pred_check
          %p690 = pneg %p147
        $region42: #{convmf_forward.1} parent=39 // pred_check_branch
          %692 = sbr.rel (%p690) target = $region44
        $region43: #{convmf_forward.1} parent=39 // pred_region
          %s694 = ssub.s32 128, 128
          %695 = vsyncadd %s686, %s694
          %s696 = smul.addr %s19, 128
          %s697 = scalar_lea.hbm %s5, %s696
          %s699 = sshll.u32 %s689, 4
          %s700 = int_to_ptr.vmem [resolvable:$true] %s699
          %702 = dma.vmem_to_hbm [thread:$0]  %s700, 128, %s697, %s686
        $region44: #{convmf_forward.1} parent=39 // pred_fallthru
          _
      $region40: #{convmf_forward.1} parent=5 // pred_fallthru
        _
      %p703 = scmp.le.s32.totalorder 2, %s14
      // Predicated region
      $region45: #{convmf_forward.1} parent=5 // pred_check
        %p704 = pneg %p703
      $region46: #{convmf_forward.1} parent=5 // pred_check_branch
        %706 = sbr.rel (%p704) target = $region48
      $region47: #{convmf_forward.1} parent=5 // pred_region
        %s707 = ssub.s32 %s14, 2
        // Predicated region
        $region49: #{convmf_forward.1} parent=47 // pred_check
          %p708 = pneg %p153
        $region50: #{convmf_forward.1} parent=47 // pred_check_branch
          %710 = sbr.rel (%p708) target = $region52
        $region51: #{convmf_forward.1} parent=47 // pred_region
          %s711 = sand.u32 %s138, 1
          %s712 = scalar_lea.sflag [#allocation3], %s711
          %s713 = sand.u32 %s138, 1
          %s714 = smul.addr %s713, 8
          %s715 = scalar_lea.vmem [#allocation2], %s714
          %716 = dma.done %s712, 128
        $region52: #{convmf_forward.1} parent=47 // pred_fallthru
          _
      $region48: #{convmf_forward.1} parent=5 // pred_fallthru
        _
    $region6: #{convmf_forward.1} parent=1 // loop_footer
      %s18 = sadd.s32 1, %s14
    $region7: #{convmf_forward.1} parent=1 // loop_footer_branch
      %13 = sbr.rel target = $region3
    $region8: #{convmf_forward.1} parent=1 // loop_exit
      _
    %717 = vsyncpa [#allocation3], 1
    %s718 = scalar_lea.sflag [#allocation3], 1
    %719 = vsyncpa %s718, 1

</llo_original>
